<compile_context>
chip_gen: v7x
topology: tpu7x:2x2x1
jax: 0.10.0
libtpu: 0.0.40
codegen_flags: <defaults>
</compile_context>

<pallas_src>
import functools

import jax
import jax.numpy as jnp
from jax import lax
from jax.experimental import pallas as pl
from jax.experimental.pallas import tpu as pltpu


# ---------------------------------------------------------------------------
# Small helpers
# ---------------------------------------------------------------------------
def _round_up(x, m):
    return ((x + m - 1) // m) * m


def _tpu_chip_traits():
    """Best-effort TPU generation detection with conservative fallbacks."""
    kind = ""
    try:
        kind = jax.devices()[0].device_kind.lower()
    except Exception:
        pass
    is_v5e = ("v5 lite" in kind) or ("v5e" in kind) or ("v5litepod" in kind)
    two_cores = ("7x" in kind) or ("v7" in kind)
    bf16_eup = any(t in kind for t in ("v6", "trillium", "7x", "v7"))
    return {"is_v5e": is_v5e, "two_cores": two_cores, "bf16_eup": bf16_eup}


def _pick_tile_b(batch, obs_dim, tile_b, two_cores):
    padded_batch = _round_up(batch, 128)
    if tile_b is None:
        # Target ~1 MiB of f32 obs per block so per-grid-step fixed overhead
        # (~0.35 us) is well amortized; cap at 8192 lanes.
        tile_b = max(128, min(8192, _round_up((1 << 20) // (4 * obs_dim), 128)))
        # v7x (2 TensorCores): keep >= 4 grid steps when the batch allows so the
        # "parallel" grid axis gives both cores work; each tile stays >= 128.
        if two_cores:
            tile_b = min(tile_b, max(128, _round_up(pl.cdiv(padded_batch, 4), 128)))
    tile_b = min(_round_up(tile_b, 128), padded_batch)
    return tile_b, padded_batch


# ---------------------------------------------------------------------------
# Kernel
# ---------------------------------------------------------------------------
def _nonlin(x, nonlin_type, act_dtype):
    if nonlin_type == "tanh":
        if act_dtype == jnp.bfloat16:
            # v6e/v7x: halve the vregs pushed through the single EUP FIFO.
            return jnp.tanh(x.astype(jnp.bfloat16)).astype(jnp.float32)
        return jnp.tanh(x)                      # EUP
    elif nonlin_type == "lrelu":
        return jnp.maximum(x, 0.01 * x)         # LeakyReLU(0.01), 2 VALU ops
    else:
        raise NotImplementedError(nonlin_type)


def _mlp_kernel(nonlin_type, act_dtype,
                w0_ref, b0_ref, w1_ref, b1_ref, wo_ref, bo_ref,
                obs_ref, out_ref):
    """One batch tile.

    obs_ref : (tile_b, obs_dim)   -- natural HBM layout, no wrapper transpose
    w0_ref  : (hidden0, obs_dim)  -- obs standardization folded in
    w1_ref  : (hidden1, hidden0), wo_ref : (act_dim, hidden1)
    b*_ref  : (dim, 1) column vectors (broadcast across lanes)
    out_ref : (act_dim, tile_b)   -- feature-major => full-width lane-dense vst
    """
    x = obs_ref[...]
    # Layer 0: trans-B matmul on the MXU -> (hidden0, tile_b), batch on lanes.
    h = lax.dot_general(w0_ref[...], x, (((1,), (1,)), ((), ())),
                        preferred_element_type=jnp.float32) + b0_ref[...]
    h = _nonlin(h, nonlin_type, act_dtype)
    h = jnp.dot(w1_ref[...], h, preferred_element_type=jnp.float32) + b1_ref[...]
    h = _nonlin(h, nonlin_type, act_dtype)
    out_ref[...] = (
        jnp.dot(wo_ref[...], h, preferred_element_type=jnp.float32) + bo_ref[...]
    ).astype(out_ref.dtype)


# ---------------------------------------------------------------------------
# Wrapper
# ---------------------------------------------------------------------------
def prepare_params(params):
    """One-time layout prep (checkpoint load time, not per-call).

    Input layout matches the effective torch module: w in (in, out), b in
    (1, out), mean/std in (1, obs_dim).  Returns kernel-layout params with the
    observation standardization folded into layer 0.
    """
    mean, std, w0, b0, w1, b1, wo, bo = params
    f32 = lambda a: jnp.asarray(a, jnp.float32)
    mean_v = f32(mean).reshape(-1)                          # (obs_dim,)
    inv_std = 1.0 / (f32(std).reshape(-1) + 1e-6)           # (obs_dim,)

    w0t = f32(w0).T                                         # (hidden0, obs_dim)
    b0v = f32(b0).reshape(-1)                               # (hidden0,)
    # W0' @ x + b0' == W0^T @ ((x - mean) * inv_std) + b0
    w0f = w0t * inv_std[None, :]
    b0f = b0v - w0f @ mean_v

    col = lambda v: f32(v).reshape(-1, 1)
    t = lambda w: f32(w).T
    return (w0f, col(b0f), t(w1), col(b1), t(wo), col(bo))


def loaded_gaussian_policy_forward(obs, prepped_params, nonlin_type="tanh",
                                   tile_b=None, bf16_tanh=None):
    """Mirrors LoadedGaussianPolicy.forward; `prepped_params` from prepare_params."""
    (w0f, b0c, w1t, b1c, wot, boc) = prepped_params
    hidden0, obs_dim = w0f.shape
    hidden1 = w1t.shape[0]
    act_dim = boc.shape[0]

    traits = _tpu_chip_traits()
    if bf16_tanh is None:
        bf16_tanh = traits["bf16_eup"]          # bf16 EUP on v6e/v7x; f32 on v5e
    act_dtype = jnp.bfloat16 if (bf16_tanh and nonlin_type == "tanh") else jnp.float32

    obs = jnp.asarray(obs, jnp.float32)
    # Glue: pad / truncate observation features to obs_dim (as in torch forward).
    if obs.shape[-1] != obs_dim:
        n_pad = obs_dim - obs.shape[-1]
        if n_pad > 0:
            obs = jnp.pad(obs, ((0, 0), (0, n_pad)))
        else:
            obs = obs[:, :obs_dim]

    batch = obs.shape[0]
    tile_b, padded_batch = _pick_tile_b(batch, obs_dim, tile_b, traits["two_cores"])
    if padded_batch != batch:
        obs = jnp.pad(obs, ((0, padded_batch - batch), (0, 0)))

    # Grid via cdiv: the last block may be partial (masked by Pallas) instead of
    # padding the batch all the way up to a multiple of tile_b.
    grid = (pl.cdiv(padded_batch, tile_b),)

    # Explicit scoped-VMEM budget with headroom (v5e default is only 16 MiB).
    per_step = 4 * tile_b * (2 * obs_dim + 2 * act_dim + 4 * max(hidden0, hidden1))
    vmem_limit = int(min(max(4 * per_step, 16 << 20), 48 << 20))

    def const_spec(arr):  # full-array block, resident across all grid steps
        return pl.BlockSpec(arr.shape, lambda i: (0, 0))

    kernel = functools.partial(_mlp_kernel, nonlin_type, act_dtype)

    out_fm = pl.pallas_call(
        kernel,
        out_shape=jax.ShapeDtypeStruct((act_dim, padded_batch), jnp.float32),
        grid=grid,
        in_specs=[
            const_spec(w0f), const_spec(b0c),
            const_spec(w1t), const_spec(b1c),
            const_spec(wot), const_spec(boc),
            pl.BlockSpec((tile_b, obs_dim), lambda i: (i, 0)),   # natural layout
        ],
        out_specs=pl.BlockSpec((act_dim, tile_b), lambda i: (0, i)),
        compiler_params=pltpu.CompilerParams(
            dimension_semantics=("parallel",),   # megacore sharding on v7x
            vmem_limit_bytes=vmem_limit,
        ),
    )(w0f, b0c, w1t, b1c, wot, boc, obs)

    # Output stays lane-dense (act_dim, batch) inside the kernel (full-width
    # stores); this tiny slice + transpose is the only layout glue left.
    # TODO(synk): expose the feature-major (act_dim, batch) output directly if a
    # consumer can take it and this transpose ever shows up in xprof.
    return out_fm[:, :batch].T


# ---------------------------------------------------------------------------
# Pure-JAX reference (raw (in, out) weights, exactly like the torch module)
# ---------------------------------------------------------------------------
def _reference_forward(obs, params, nonlin_type="tanh"):
    mean, std, w0, b0, w1, b1, wo, bo = params

    def nonlin(x):
        return jnp.tanh(x) if nonlin_type == "tanh" else jnp.where(x >= 0, x, 0.01 * x)

    h = (obs - mean) / (std + 1e-6)
    h = nonlin(h @ w0 + b0)
    h = nonlin(h @ w1 + b1)
    return h @ wo + bo


def make_params(key, obs_dim, hidden_dim, act_dim):
    """Deterministic synthetic parameters (stand-in for the pickled checkpoint)."""
    ks = jax.random.split(key, 8)
    mean = jax.random.normal(ks[0], (1, obs_dim), jnp.float32) * 0.1
    std = jnp.abs(jax.random.normal(ks[1], (1, obs_dim), jnp.float32)) + 0.5
    w0 = jax.random.normal(ks[2], (obs_dim, hidden_dim), jnp.float32) * 0.1
    b0 = jax.random.normal(ks[3], (1, hidden_dim), jnp.float32) * 0.1
    w1 = jax.random.normal(ks[4], (hidden_dim, hidden_dim), jnp.float32) * 0.1
    b1 = jax.random.normal(ks[5], (1, hidden_dim), jnp.float32) * 0.1
    wo = jax.random.normal(ks[6], (hidden_dim, act_dim), jnp.float32) * 0.1
    bo = jax.random.normal(ks[7], (1, act_dim), jnp.float32) * 0.1
    return (mean, std, w0, b0, w1, b1, wo, bo)


if __name__ == "__main__":
    batch, obs_dim, hidden_dim, act_dim = 8, 16, 32, 8
    key = jax.random.PRNGKey(0)
    pkey, xkey, xkey2 = jax.random.split(key, 3)

    params = make_params(pkey, obs_dim, hidden_dim, act_dim)
    prepped = prepare_params(params)

    # Case 1: tiny batch, tanh (f32 activations for a strict comparison).
    obs = jax.random.normal(xkey, (batch, obs_dim), jnp.float32)
    out = loaded_gaussian_policy_forward(obs, prepped, "tanh", bf16_tanh=False)
    out = jax.block_until_ready(out)
    ref = _reference_forward(obs, params, "tanh")
    assert out.shape == (batch, act_dim)
    assert jnp.allclose(out, ref, atol=1e-3, rtol=1e-3), (
        f"max abs err {float(jnp.max(jnp.abs(out - ref)))}")

    # Case 2: lrelu path.
    out2 = jax.block_until_ready(
        loaded_gaussian_policy_forward(obs, prepped, "lrelu", bf16_tanh=False))
    ref2 = _reference_forward(obs, params, "lrelu")
    assert jnp.allclose(out2, ref2, atol=1e-3, rtol=1e-3)

    # Case 3: multi-tile grid with a partial last block (batch=300, tile_b=256)
    # and an observation that needs feature padding (12 -> 16), like the torch glue.
    obs3 = jax.random.normal(xkey2, (300, obs_dim - 4), jnp.float32)
    out3 = jax.block_until_ready(
        loaded_gaussian_policy_forward(obs3, prepped, "tanh", tile_b=256,
                                       bf16_tanh=False))
    ref3 = _reference_forward(jnp.pad(obs3, ((0, 0), (0, 4))), params, "tanh")
    assert out3.shape == (300, act_dim)
    assert jnp.allclose(out3, ref3, atol=1e-3, rtol=1e-3), (
        f"max abs err {float(jnp.max(jnp.abs(out3 - ref3)))}")

    # Case 4: bf16-tanh activations, only on chips with a bf16 EUP (v6e/v7x).
    if _tpu_chip_traits()["bf16_eup"]:
        out4 = jax.block_until_ready(
            loaded_gaussian_policy_forward(obs, prepped, "tanh", bf16_tanh=True))
        assert jnp.allclose(out4, ref, atol=3e-2, rtol=3e-2)

    print("KERNEL_OK")
</pallas_src>

<mosaic_0001>
module attributes {stable_mosaic.version = 11 : i64} {
  func.func @_mlp_kernel(%arg0: i32, %arg1: memref<32x16xf32, #tpu.memory_space<vmem>>, %arg2: memref<32x1xf32, #tpu.memory_space<vmem>>, %arg3: memref<32x32xf32, #tpu.memory_space<vmem>>, %arg4: memref<32x1xf32, #tpu.memory_space<vmem>>, %arg5: memref<8x32xf32, #tpu.memory_space<vmem>>, %arg6: memref<8x1xf32, #tpu.memory_space<vmem>>, %arg7: memref<128x16xf32, #tpu.memory_space<vmem>>, %arg8: memref<8x128xf32, #tpu.memory_space<vmem>>) attributes {dimension_semantics = [#tpu.dimension_semantics<parallel>], iteration_bounds = array<i64: 1>, scalar_prefetch = 0 : i64, scratch_operands = 0 : i64, tpu.core_type = #tpu.core_type<tc>, window_params = [{pipeline_mode = #tpu.pipeline_mode<synchronous>, transform_indices = @transform_0, window_bounds = array<i64: 32, 16>}, {pipeline_mode = #tpu.pipeline_mode<synchronous>, transform_indices = @transform_1, window_bounds = array<i64: 32, 1>}, {pipeline_mode = #tpu.pipeline_mode<synchronous>, transform_indices = @transform_2, window_bounds = array<i64: 32, 32>}, {pipeline_mode = #tpu.pipeline_mode<synchronous>, transform_indices = @transform_3, window_bounds = array<i64: 32, 1>}, {pipeline_mode = #tpu.pipeline_mode<synchronous>, transform_indices = @transform_4, window_bounds = array<i64: 8, 32>}, {pipeline_mode = #tpu.pipeline_mode<synchronous>, transform_indices = @transform_5, window_bounds = array<i64: 8, 1>}, {transform_indices = @transform_6, window_bounds = array<i64: 128, 16>}, {transform_indices = @transform_7, window_bounds = array<i64: 8, 128>}]} {
    %c0 = arith.constant 0 : index
    %c0_0 = arith.constant 0 : index
    %0 = vector.load %arg7[%c0, %c0_0] : memref<128x16xf32, #tpu.memory_space<vmem>>, vector<128x16xf32>
    %c0_1 = arith.constant 0 : index
    %c0_2 = arith.constant 0 : index
    %1 = vector.load %arg1[%c0_1, %c0_2] : memref<32x16xf32, #tpu.memory_space<vmem>>, vector<32x16xf32>
    %cst = arith.constant dense<0.000000e+00> : vector<32x128xf32>
    %2 = tpu.matmul %1, %0, %cst {dimension_numbers = #tpu.dot_dimension_numbers<[1], [1], [0], [0], [0, 0, 1, 0], [], []>} : vector<32x16xf32>, vector<128x16xf32>, vector<32x128xf32> -> vector<32x128xf32>
    %c0_3 = arith.constant 0 : index
    %c0_4 = arith.constant 0 : index
    %3 = vector.load %arg2[%c0_3, %c0_4] : memref<32x1xf32, #tpu.memory_space<vmem>>, vector<32x1xf32>
    %4 = vector.broadcast %3 : vector<32x1xf32> to vector<32x128xf32>
    %5 = arith.addf %2, %4 : vector<32x128xf32>
    %6 = math.tanh %5 : vector<32x128xf32>
    %c0_5 = arith.constant 0 : index
    %c0_6 = arith.constant 0 : index
    %7 = vector.load %arg3[%c0_5, %c0_6] : memref<32x32xf32, #tpu.memory_space<vmem>>, vector<32x32xf32>
    %cst_7 = arith.constant dense<0.000000e+00> : vector<32x128xf32>
    %8 = tpu.matmul %7, %6, %cst_7 {dimension_numbers = #tpu.dot_dimension_numbers<[1], [0], [0], [1], [0, 0, 1, 1], [], []>} : vector<32x32xf32>, vector<32x128xf32>, vector<32x128xf32> -> vector<32x128xf32>
    %c0_8 = arith.constant 0 : index
    %c0_9 = arith.constant 0 : index
    %9 = vector.load %arg4[%c0_8, %c0_9] : memref<32x1xf32, #tpu.memory_space<vmem>>, vector<32x1xf32>
    %10 = vector.broadcast %9 : vector<32x1xf32> to vector<32x128xf32>
    %11 = arith.addf %8, %10 : vector<32x128xf32>
    %12 = math.tanh %11 : vector<32x128xf32>
    %c0_10 = arith.constant 0 : index
    %c0_11 = arith.constant 0 : index
    %13 = vector.load %arg5[%c0_10, %c0_11] : memref<8x32xf32, #tpu.memory_space<vmem>>, vector<8x32xf32>
    %cst_12 = arith.constant dense<0.000000e+00> : vector<8x128xf32>
    %14 = tpu.matmul %13, %12, %cst_12 {dimension_numbers = #tpu.dot_dimension_numbers<[1], [0], [0], [1], [0, 0, 1, 1], [], []>} : vector<8x32xf32>, vector<32x128xf32>, vector<8x128xf32> -> vector<8x128xf32>
    %c0_13 = arith.constant 0 : index
    %c0_14 = arith.constant 0 : index
    %15 = vector.load %arg6[%c0_13, %c0_14] : memref<8x1xf32, #tpu.memory_space<vmem>>, vector<8x1xf32>
    %16 = vector.broadcast %15 : vector<8x1xf32> to vector<8x128xf32>
    %17 = arith.addf %14, %16 : vector<8x128xf32>
    %c0_15 = arith.constant 0 : index
    %c0_16 = arith.constant 0 : index
    %18 = vector.load %arg8[%c0_15, %c0_16] : memref<8x128xf32, #tpu.memory_space<vmem>>, vector<8x128xf32>
    tpu.vector_store %arg8[%c0_15, %c0_16], %17 {strides = array<i32>} : memref<8x128xf32, #tpu.memory_space<vmem>>, vector<8x128xf32>,
    return
  }
  func.func @transform_0(%arg0: i32) -> (i32, i32) {
    %c0_i32 = arith.constant 0 : i32
    %c0_i32_0 = arith.constant 0 : i32
    %c0_i32_1 = arith.constant 0 : i32
    return %c0_i32, %c0_i32_0 : i32, i32
  }
  func.func @transform_1(%arg0: i32) -> (i32, i32) {
    %c0_i32 = arith.constant 0 : i32
    %c0_i32_0 = arith.constant 0 : i32
    %c0_i32_1 = arith.constant 0 : i32
    return %c0_i32, %c0_i32_0 : i32, i32
  }
  func.func @transform_2(%arg0: i32) -> (i32, i32) {
    %c0_i32 = arith.constant 0 : i32
    %c0_i32_0 = arith.constant 0 : i32
    %c0_i32_1 = arith.constant 0 : i32
    return %c0_i32, %c0_i32_0 : i32, i32
  }
  func.func @transform_3(%arg0: i32) -> (i32, i32) {
    %c0_i32 = arith.constant 0 : i32
    %c0_i32_0 = arith.constant 0 : i32
    %c0_i32_1 = arith.constant 0 : i32
    return %c0_i32, %c0_i32_0 : i32, i32
  }
  func.func @transform_4(%arg0: i32) -> (i32, i32) {
    %c0_i32 = arith.constant 0 : i32
    %c0_i32_0 = arith.constant 0 : i32
    %c0_i32_1 = arith.constant 0 : i32
    return %c0_i32, %c0_i32_0 : i32, i32
  }
  func.func @transform_5(%arg0: i32) -> (i32, i32) {
    %c0_i32 = arith.constant 0 : i32
    %c0_i32_0 = arith.constant 0 : i32
    %c0_i32_1 = arith.constant 0 : i32
    return %c0_i32, %c0_i32_0 : i32, i32
  }
  func.func @transform_6(%arg0: i32) -> (i32, i32) {
    %c0_i32 = arith.constant 0 : i32
    %c0_i32_0 = arith.constant 0 : i32
    return %arg0, %c0_i32 : i32, i32
  }
  func.func @transform_7(%arg0: i32) -> (i32, i32) {
    %c0_i32 = arith.constant 0 : i32
    %c0_i32_0 = arith.constant 0 : i32
    return %c0_i32, %arg0 : i32, i32
  }
}

</mosaic_0001>

<llo_original>
// kernel: tpu_custom_call.1
$region0: #{tpu_custom_call.1}
  #allocation0 [shape = 'u32[]', space=smem, size = 0x4, offset = 0x4, fixed_abs, tag = 'smem constant byte address 0x4 - core index']
  #allocation1 [shape = 'u32[144,128]{1,0:T(1,128)}', space=vmem, size = 0x12000, scoped, tag = 'internal scratch']
  %s0 = inlined_call_operand.vmem [shape: f32[32,16], index: 0, kind: input, shape index: {}]
  %s1 = inlined_call_operand.vmem [shape: f32[32,1], index: 1, kind: input, shape index: {}]
  %s2 = inlined_call_operand.vmem [shape: f32[32,32], index: 2, kind: input, shape index: {}]
  %s3 = inlined_call_operand.vmem [shape: f32[32,1], index: 3, kind: input, shape index: {}]
  %s4 = inlined_call_operand.vmem [shape: f32[8,32], index: 4, kind: input, shape index: {}]
  %s5 = inlined_call_operand.vmem [shape: f32[8,1], index: 5, kind: input, shape index: {}]
  %s6 = inlined_call_operand.vmem [shape: f32[128,16], index: 6, kind: input, shape index: {}]
  %s7 = inlined_call_operand.hbm [shape: f32[8,128], index: 7, kind: output, shape index: {}]
  %s8 = sld [smem:[#allocation0]]
  $region38: #{tpu_custom_call.1} parent=0
    _
  %s10 = ssub.s32 1, %s8
  %s11 = scalar_select 0, %s10, %s8
  $region1: #{tpu_custom_call.1} parent=0
    #allocation2 [shape = 'u8[4096]{0}', space=vmem, size = 0x1000, scoped, tag = 'output window, operand 0, single buffered']
    #allocation3 [shape = 's32[1]{0}', space=sflag, size = 0x4, scoped, tag = 'scoped memory for tpu_custom_call.1']
    %12 = vsyncpa [#allocation3], 0
    // Predicated region
    $region2: #{tpu_custom_call.1} parent=1 // pred_check
      _
    $region3: #{tpu_custom_call.1} parent=1 // pred_check_branch
      %14 = sbr.rel (0) target = $region5
    $region4: #{tpu_custom_call.1} parent=1 // pred_region
      _
    $region5: #{tpu_custom_call.1} parent=1 // pred_fallthru
      _
    // Predicated region
    $region6: #{tpu_custom_call.1} parent=1 // pred_check
      _
    $region7: #{tpu_custom_call.1} parent=1 // pred_check_branch
      %16 = sbr.rel (0) target = $region9
    $region8: #{tpu_custom_call.1} parent=1 // pred_region
      _
    $region9: #{tpu_custom_call.1} parent=1 // pred_fallthru
      _
    // Predicated region
    $region10: #{tpu_custom_call.1} parent=1 // pred_check
      _
    $region11: #{tpu_custom_call.1} parent=1 // pred_check_branch
      %18 = sbr.rel (0) target = $region13
    $region12: #{tpu_custom_call.1} parent=1 // pred_region
      _
    $region13: #{tpu_custom_call.1} parent=1 // pred_fallthru
      _
    // Predicated region
    $region14: #{tpu_custom_call.1} parent=1 // pred_check
      _
    $region15: #{tpu_custom_call.1} parent=1 // pred_check_branch
      %20 = sbr.rel (0) target = $region17
    $region16: #{tpu_custom_call.1} parent=1 // pred_region
      _
    $region17: #{tpu_custom_call.1} parent=1 // pred_fallthru
      _
    // Predicated region
    $region18: #{tpu_custom_call.1} parent=1 // pred_check
      _
    $region19: #{tpu_custom_call.1} parent=1 // pred_check_branch
      %22 = sbr.rel (0) target = $region21
    $region20: #{tpu_custom_call.1} parent=1 // pred_region
      _
    $region21: #{tpu_custom_call.1} parent=1 // pred_fallthru
      _
    // Predicated region
    $region22: #{tpu_custom_call.1} parent=1 // pred_check
      _
    $region23: #{tpu_custom_call.1} parent=1 // pred_check_branch
      %24 = sbr.rel (0) target = $region25
    $region24: #{tpu_custom_call.1} parent=1 // pred_region
      _
    $region25: #{tpu_custom_call.1} parent=1 // pred_fallthru
      _
    // Predicated region
    $region26: #{tpu_custom_call.1} parent=1 // pred_check
      _
    $region27: #{tpu_custom_call.1} parent=1 // pred_check_branch
      %26 = sbr.rel (0) target = $region29
    $region28: #{tpu_custom_call.1} parent=1 // pred_region
      _
    $region29: #{tpu_custom_call.1} parent=1 // pred_fallthru
      _
    %v27 = vld [vmem:[%s6] sm:$0xff]
    %v28 = vld [vmem:[%s6 + $0x8] sm:$0xff]
    %v29 = vld [vmem:[%s6 + $0x10] sm:$0xff]
    %v30 = vld [vmem:[%s6 + $0x18] sm:$0xff]
    %v31 = vld [vmem:[%s6 + $0x20] sm:$0xff]
    %v32 = vld [vmem:[%s6 + $0x28] sm:$0xff]
    %v33 = vld [vmem:[%s6 + $0x30] sm:$0xff]
    %v34 = vld [vmem:[%s6 + $0x38] sm:$0xff]
    %v35 = vld [vmem:[%s6 + $0x40] sm:$0xff]
    %v36 = vld [vmem:[%s6 + $0x48] sm:$0xff]
    %v37 = vld [vmem:[%s6 + $0x50] sm:$0xff]
    %v38 = vld [vmem:[%s6 + $0x58] sm:$0xff]
    %v39 = vld [vmem:[%s6 + $0x60] sm:$0xff]
    %v40 = vld [vmem:[%s6 + $0x68] sm:$0xff]
    %v41 = vld [vmem:[%s6 + $0x70] sm:$0xff]
    %v42 = vld [vmem:[%s6 + $0x78] sm:$0xff]
    %v43 = vld [vmem:[%s0] sm:$0xff]
    %v44 = vld [vmem:[%s0 + $0x8] sm:$0xff]
    %v45 = vld [vmem:[%s0 + $0x10] sm:$0xff]
    %v46 = vld [vmem:[%s0 + $0x18] sm:$0xff]
    %v47 = vld [vmem:[%s1] sm:$0xff]
    %v48 = vld [vmem:[%s1 + $0x8] sm:$0xff]
    %v49 = vld [vmem:[%s1 + $0x10] sm:$0xff]
    %v50 = vld [vmem:[%s1 + $0x18] sm:$0xff]
    %52 = vset.pattern.permute.xlu0 0
    %53 = vperm.xlu0 %52, %v47
    %v54 = vpop.permute.xlu0 %53
    %57 = vset.pattern.permute.xlu0 0
    %58 = vperm.xlu0 %57, %v48
    %v59 = vpop.permute.xlu0 %58
    %62 = vset.pattern.permute.xlu0 0
    %63 = vperm.xlu0 %62, %v49
    %v64 = vpop.permute.xlu0 %63
    %67 = vset.pattern.permute.xlu0 0
    %68 = vperm.xlu0 %67, %v50
    %v69 = vpop.permute.xlu0 %68
    %vm71 = vcmask 130048
    %v73 = vsel %vm71, %v43, 0
    %v76 = vsel %vm71, %v44, 0
    %v79 = vsel %vm71, %v45, 0
    %v82 = vsel %vm71, %v46, 0
    %v85 = vsel %vm71, %v27, 0
    %v88 = vsel %vm71, %v28, 0
    %v91 = vsel %vm71, %v29, 0
    %v94 = vsel %vm71, %v30, 0
    %v97 = vsel %vm71, %v31, 0
    %v100 = vsel %vm71, %v32, 0
    %v103 = vsel %vm71, %v33, 0
    %v106 = vsel %vm71, %v34, 0
    %v109 = vsel %vm71, %v35, 0
    %v112 = vsel %vm71, %v36, 0
    %v115 = vsel %vm71, %v37, 0
    %v118 = vsel %vm71, %v38, 0
    %v121 = vsel %vm71, %v39, 0
    %v124 = vsel %vm71, %v40, 0
    %v127 = vsel %vm71, %v41, 0
    %v130 = vsel %vm71, %v42, 0
    %132 = vmatprep.subr.mxu0 0.0
    %133 = vmatpush1.xpose.msra.mxu0 %v85
    %134 = vmatprep.subr.mxu0 0.0
    %135 = vmatpush1.xpose.msra.mxu0 %v88
    %136 = vmatprep.subr.mxu0 0.0
    %137 = vmatpush1.xpose.msra.mxu0 %v91
    %138 = vmatprep.subr.mxu0 0.0
    %139 = vmatpush1.xpose.msra.mxu0 %v94
    %140 = vmatprep.subr.mxu0 0.0
    %141 = vmatpush1.xpose.msra.mxu0 %v97
    %142 = vmatprep.subr.mxu0 0.0
    %143 = vmatpush1.xpose.msra.mxu0 %v100
    %144 = vmatprep.subr.mxu0 0.0
    %145 = vmatpush1.xpose.msra.mxu0 %v103
    %146 = vmatprep.subr.mxu0 0.0
    %147 = vmatpush1.xpose.msra.mxu0 %v106
    %148 = vmatprep.subr.mxu0 0.0
    %149 = vmatpush1.xpose.msra.mxu0 %v109
    %150 = vmatprep.subr.mxu0 0.0
    %151 = vmatpush1.xpose.msra.mxu0 %v112
    %152 = vmatprep.subr.mxu0 0.0
    %153 = vmatpush1.xpose.msra.mxu0 %v115
    %154 = vmatprep.subr.mxu0 0.0
    %155 = vmatpush1.xpose.msra.mxu0 %v118
    %156 = vmatprep.subr.mxu0 0.0
    %157 = vmatpush1.xpose.msra.mxu0 %v121
    %158 = vmatprep.subr.mxu0 0.0
    %159 = vmatpush1.xpose.msra.mxu0 %v124
    %160 = vmatprep.subr.mxu0 0.0
    %161 = vmatpush1.xpose.msra.mxu0 %v127
    %162 = vmatprep.subr.mxu0 0.0
    %163 = vmatpush1.xpose.msra.mxu0 %v130
    %164 = vmatprep.subr.mxu0 0.0
    %165 = vmatpush1.xpose.msra.mxu0 0.0
    %166 = vmatprep.subr.mxu0 0.0
    %167 = vmatpush1.xpose.msra.mxu0 0.0
    %168 = vmatprep.subr.mxu0 0.0
    %169 = vmatpush1.xpose.msra.mxu0 0.0
    %170 = vmatprep.subr.mxu0 0.0
    %171 = vmatpush1.xpose.msra.mxu0 0.0
    %172 = vmatprep.subr.mxu0 0.0
    %173 = vmatpush1.xpose.msra.mxu0 0.0
    %174 = vmatprep.subr.mxu0 0.0
    %175 = vmatpush1.xpose.msra.mxu0 0.0
    %176 = vmatprep.subr.mxu0 0.0
    %177 = vmatpush1.xpose.msra.mxu0 0.0
    %178 = vmatprep.subr.mxu0 0.0
    %179 = vmatpush1.xpose.msra.mxu0 0.0
    %180 = vmatprep.subr.mxu0 0.0
    %181 = vmatpush1.xpose.msra.mxu0 0.0
    %182 = vmatprep.subr.mxu0 0.0
    %183 = vmatpush1.xpose.msra.mxu0 0.0
    %184 = vmatprep.subr.mxu0 0.0
    %185 = vmatpush1.xpose.msra.mxu0 0.0
    %186 = vmatprep.subr.mxu0 0.0
    %187 = vmatpush1.xpose.msra.mxu0 0.0
    %188 = vmatprep.subr.mxu0 0.0
    %189 = vmatpush1.xpose.msra.mxu0 0.0
    %190 = vmatprep.subr.mxu0 0.0
    %191 = vmatpush1.xpose.msra.mxu0 0.0
    %192 = vmatprep.subr.mxu0 0.0
    %193 = vmatpush1.xpose.msra.mxu0 0.0
    %194 = vmatprep.subr.mxu0 0.0
    %195 = vmatpush1.xpose.msra.mxu0 0.0
    %196 = vmatprep.mubr.f32.mxu0 0.0
    %197 = vmatmul.mubr.f32.gmra.mrb[0].mxu0 %v73
    %v198 = vpop.f32.mrb[0].mxu0
    %v199 = vadd.f32 %v54, %v198
    %v200 = vpop.f32.mrb[0].mxu0
    %201 = vmatprep.mubr.f32.mxu0 0.0
    %202 = vmatmul.mubr.f32.gmra.mrb[0].mxu0 %v76
    %v203 = vpop.f32.mrb[0].mxu0
    %v204 = vadd.f32 %v59, %v203
    %v205 = vpop.f32.mrb[0].mxu0
    %206 = vmatprep.mubr.f32.mxu0 0.0
    %207 = vmatmul.mubr.f32.gmra.mrb[0].mxu0 %v79
    %v208 = vpop.f32.mrb[0].mxu0
    %v209 = vadd.f32 %v64, %v208
    %v210 = vpop.f32.mrb[0].mxu0
    %211 = vmatprep.mubr.f32.mxu0 0.0
    %212 = vmatmul.mubr.f32.gmra.mrb[0].mxu0 %v82
    %v213 = vpop.f32.mrb[0].mxu0
    %v214 = vadd.f32 %v69, %v213
    %v215 = vpop.f32.mrb[0].mxu0
    %216 = vdwg.mxu0
    %v217 = vtanh.pop %v199
    %v218 = vtanh.pop %v204
    %v219 = vtanh.pop %v209
    %v220 = vtanh.pop %v214
    %v221 = vld [vmem:[%s2] sm:$0xff]
    %v222 = vld [vmem:[%s2 + $0x8] sm:$0xff]
    %v223 = vld [vmem:[%s2 + $0x10] sm:$0xff]
    %v224 = vld [vmem:[%s2 + $0x18] sm:$0xff]
    %v225 = vld [vmem:[%s3] sm:$0xff]
    %v226 = vld [vmem:[%s3 + $0x8] sm:$0xff]
    %v227 = vld [vmem:[%s3 + $0x10] sm:$0xff]
    %v228 = vld [vmem:[%s3 + $0x18] sm:$0xff]
    %230 = vset.pattern.permute.xlu0 0
    %231 = vperm.xlu0 %230, %v225
    %v232 = vpop.permute.xlu0 %231
    %235 = vset.pattern.permute.xlu0 0
    %236 = vperm.xlu0 %235, %v226
    %v237 = vpop.permute.xlu0 %236
    %240 = vset.pattern.permute.xlu0 0
    %241 = vperm.xlu0 %240, %v227
    %v242 = vpop.permute.xlu0 %241
    %245 = vset.pattern.permute.xlu0 0
    %246 = vperm.xlu0 %245, %v228
    %v247 = vpop.permute.xlu0 %246
    %vm249 = vcmask 261120
    %v251 = vsel %vm249, %v221, 0
    %v254 = vsel %vm249, %v222, 0
    %v257 = vsel %vm249, %v223, 0
    %v260 = vsel %vm249, %v224, 0
    %262 = vmatprep.subr.mxu0 0.0
    %263 = vmatpush1.msra.mxu0 %v217
    %264 = vmatprep.subr.mxu0 0.0
    %265 = vmatpush1.msra.mxu0 %v218
    %266 = vmatprep.subr.mxu0 0.0
    %267 = vmatpush1.msra.mxu0 %v219
    %268 = vmatprep.subr.mxu0 0.0
    %269 = vmatpush1.msra.mxu0 %v220
    %270 = vmatprep.subr.mxu0 0.0
    %271 = vmatpush1.msra.mxu0 0.0
    %272 = vmatprep.subr.mxu0 0.0
    %273 = vmatpush1.msra.mxu0 0.0
    %274 = vmatprep.subr.mxu0 0.0
    %275 = vmatpush1.msra.mxu0 0.0
    %276 = vmatprep.subr.mxu0 0.0
    %277 = vmatpush1.msra.mxu0 0.0
    %278 = vmatprep.subr.mxu0 0.0
    %279 = vmatpush1.msra.mxu0 0.0
    %280 = vmatprep.subr.mxu0 0.0
    %281 = vmatpush1.msra.mxu0 0.0
    %282 = vmatprep.subr.mxu0 0.0
    %283 = vmatpush1.msra.mxu0 0.0
    %284 = vmatprep.subr.mxu0 0.0
    %285 = vmatpush1.msra.mxu0 0.0
    %286 = vmatprep.subr.mxu0 0.0
    %287 = vmatpush1.msra.mxu0 0.0
    %288 = vmatprep.subr.mxu0 0.0
    %289 = vmatpush1.msra.mxu0 0.0
    %290 = vmatprep.subr.mxu0 0.0
    %291 = vmatpush1.msra.mxu0 0.0
    %292 = vmatprep.subr.mxu0 0.0
    %293 = vmatpush1.msra.mxu0 0.0
    %294 = vmatprep.subr.mxu0 0.0
    %295 = vmatpush1.msra.mxu0 0.0
    %296 = vmatprep.subr.mxu0 0.0
    %297 = vmatpush1.msra.mxu0 0.0
    %298 = vmatprep.subr.mxu0 0.0
    %299 = vmatpush1.msra.mxu0 0.0
    %300 = vmatprep.subr.mxu0 0.0
    %301 = vmatpush1.msra.mxu0 0.0
    %302 = vmatprep.subr.mxu0 0.0
    %303 = vmatpush1.msra.mxu0 0.0
    %304 = vmatprep.subr.mxu0 0.0
    %305 = vmatpush1.msra.mxu0 0.0
    %306 = vmatprep.subr.mxu0 0.0
    %307 = vmatpush1.msra.mxu0 0.0
    %308 = vmatprep.subr.mxu0 0.0
    %309 = vmatpush1.msra.mxu0 0.0
    %310 = vmatprep.subr.mxu0 0.0
    %311 = vmatpush1.msra.mxu0 0.0
    %312 = vmatprep.subr.mxu0 0.0
    %313 = vmatpush1.msra.mxu0 0.0
    %314 = vmatprep.subr.mxu0 0.0
    %315 = vmatpush1.msra.mxu0 0.0
    %316 = vmatprep.subr.mxu0 0.0
    %317 = vmatpush1.msra.mxu0 0.0
    %318 = vmatprep.subr.mxu0 0.0
    %319 = vmatpush1.msra.mxu0 0.0
    %320 = vmatprep.subr.mxu0 0.0
    %321 = vmatpush1.msra.mxu0 0.0
    %322 = vmatprep.subr.mxu0 0.0
    %323 = vmatpush1.msra.mxu0 0.0
    %324 = vmatprep.subr.mxu0 0.0
    %325 = vmatpush1.msra.mxu0 0.0
    %326 = vmatprep.mubr.f32.mxu0 0.0
    %327 = vmatmul.mubr.f32.gmra.mrb[0].mxu0 %v251
    %v328 = vpop.f32.mrb[0].mxu0
    %v329 = vadd.f32 %v232, %v328
    %v330 = vpop.f32.mrb[0].mxu0
    %331 = vmatprep.mubr.f32.mxu0 0.0
    %332 = vmatmul.mubr.f32.gmra.mrb[0].mxu0 %v254
    %v333 = vpop.f32.mrb[0].mxu0
    %v334 = vadd.f32 %v237, %v333
    %v335 = vpop.f32.mrb[0].mxu0
    %336 = vmatprep.mubr.f32.mxu0 0.0
    %337 = vmatmul.mubr.f32.gmra.mrb[0].mxu0 %v257
    %v338 = vpop.f32.mrb[0].mxu0
    %v339 = vadd.f32 %v242, %v338
    %v340 = vpop.f32.mrb[0].mxu0
    %341 = vmatprep.mubr.f32.mxu0 0.0
    %342 = vmatmul.mubr.f32.gmra.mrb[0].mxu0 %v260
    %v343 = vpop.f32.mrb[0].mxu0
    %v344 = vadd.f32 %v247, %v343
    %v345 = vpop.f32.mrb[0].mxu0
    %346 = vdwg.mxu0
    %v347 = vtanh.pop %v329
    %v348 = vtanh.pop %v334
    %v349 = vtanh.pop %v339
    %v350 = vtanh.pop %v344
    %v351 = vld [vmem:[%s4] sm:$0xff]
    %v352 = vld [vmem:[%s5] sm:$0xff]
    %354 = vset.pattern.permute.xlu0 0
    %355 = vperm.xlu0 %354, %v352
    %v356 = vpop.permute.xlu0 %355
    %v359 = vsel %vm249, %v351, 0
    %361 = vmatprep.subr.mxu0 0.0
    %362 = vmatpush1.msra.mxu0 %v347
    %363 = vmatprep.subr.mxu0 0.0
    %364 = vmatpush1.msra.mxu0 %v348
    %365 = vmatprep.subr.mxu0 0.0
    %366 = vmatpush1.msra.mxu0 %v349
    %367 = vmatprep.subr.mxu0 0.0
    %368 = vmatpush1.msra.mxu0 %v350
    %369 = vmatprep.subr.mxu0 0.0
    %370 = vmatpush1.msra.mxu0 0.0
    %371 = vmatprep.subr.mxu0 0.0
    %372 = vmatpush1.msra.mxu0 0.0
    %373 = vmatprep.subr.mxu0 0.0
    %374 = vmatpush1.msra.mxu0 0.0
    %375 = vmatprep.subr.mxu0 0.0
    %376 = vmatpush1.msra.mxu0 0.0
    %377 = vmatprep.subr.mxu0 0.0
    %378 = vmatpush1.msra.mxu0 0.0
    %379 = vmatprep.subr.mxu0 0.0
    %380 = vmatpush1.msra.mxu0 0.0
    %381 = vmatprep.subr.mxu0 0.0
    %382 = vmatpush1.msra.mxu0 0.0
    %383 = vmatprep.subr.mxu0 0.0
    %384 = vmatpush1.msra.mxu0 0.0
    %385 = vmatprep.subr.mxu0 0.0
    %386 = vmatpush1.msra.mxu0 0.0
    %387 = vmatprep.subr.mxu0 0.0
    %388 = vmatpush1.msra.mxu0 0.0
    %389 = vmatprep.subr.mxu0 0.0
    %390 = vmatpush1.msra.mxu0 0.0
    %391 = vmatprep.subr.mxu0 0.0
    %392 = vmatpush1.msra.mxu0 0.0
    %393 = vmatprep.subr.mxu0 0.0
    %394 = vmatpush1.msra.mxu0 0.0
    %395 = vmatprep.subr.mxu0 0.0
    %396 = vmatpush1.msra.mxu0 0.0
    %397 = vmatprep.subr.mxu0 0.0
    %398 = vmatpush1.msra.mxu0 0.0
    %399 = vmatprep.subr.mxu0 0.0
    %400 = vmatpush1.msra.mxu0 0.0
    %401 = vmatprep.subr.mxu0 0.0
    %402 = vmatpush1.msra.mxu0 0.0
    %403 = vmatprep.subr.mxu0 0.0
    %404 = vmatpush1.msra.mxu0 0.0
    %405 = vmatprep.subr.mxu0 0.0
    %406 = vmatpush1.msra.mxu0 0.0
    %407 = vmatprep.subr.mxu0 0.0
    %408 = vmatpush1.msra.mxu0 0.0
    %409 = vmatprep.subr.mxu0 0.0
    %410 = vmatpush1.msra.mxu0 0.0
    %411 = vmatprep.subr.mxu0 0.0
    %412 = vmatpush1.msra.mxu0 0.0
    %413 = vmatprep.subr.mxu0 0.0
    %414 = vmatpush1.msra.mxu0 0.0
    %415 = vmatprep.subr.mxu0 0.0
    %416 = vmatpush1.msra.mxu0 0.0
    %417 = vmatprep.subr.mxu0 0.0
    %418 = vmatpush1.msra.mxu0 0.0
    %419 = vmatprep.subr.mxu0 0.0
    %420 = vmatpush1.msra.mxu0 0.0
    %421 = vmatprep.subr.mxu0 0.0
    %422 = vmatpush1.msra.mxu0 0.0
    %423 = vmatprep.subr.mxu0 0.0
    %424 = vmatpush1.msra.mxu0 0.0
    %425 = vmatprep.mubr.f32.mxu0 0.0
    %426 = vmatmul.mubr.f32.gmra.mrb[0].mxu0 %v359
    %v427 = vpop.f32.mrb[0].mxu0
    %v428 = vadd.f32 %v356, %v427
    %v429 = vpop.f32.mrb[0].mxu0
    %430 = vdwg.mxu0
    %431 = vst [vmem:[#allocation2] sm:$0xff] %v428
    // Predicated region
    $region30: #{tpu_custom_call.1} parent=1 // pred_check
      _
    $region31: #{tpu_custom_call.1} parent=1 // pred_check_branch
      %433 = sbr.rel (0) target = $region33
    $region32: #{tpu_custom_call.1} parent=1 // pred_region
      %s435 = ssub.s32 128, 128
      %436 = vsyncadd [#allocation3], %s435
      %s438 = sshll.u32 [#allocation2], 4
      %s439 = int_to_ptr.vmem [resolvable:$true] %s438
      %441 = dma.vmem_to_hbm [thread:$0]  %s439, 128, %s7, [#allocation3]
    $region33: #{tpu_custom_call.1} parent=1 // pred_fallthru
      _
    // Predicated region
    $region34: #{tpu_custom_call.1} parent=1 // pred_check
      _
    $region35: #{tpu_custom_call.1} parent=1 // pred_check_branch
      %443 = sbr.rel (0) target = $region37
    $region36: #{tpu_custom_call.1} parent=1 // pred_region
      %444 = dma.done [#allocation3], 128
    $region37: #{tpu_custom_call.1} parent=1 // pred_fallthru
      _
    %445 = vsyncpa [#allocation3], 1

</llo_original>
